<compile_context>
chip_gen: v6e
topology: v6e:2x2x1
jax: 0.10.0
libtpu: 0.0.40
codegen_flags: <defaults>
</compile_context>

<pallas_src>
import functools

import numpy as np
import jax
import jax.numpy as jnp
from jax import lax
from jax.experimental import pallas as pl
from jax.experimental.pallas import tpu as pltpu

NEG_SLOPE = 0.01  # nn.LeakyReLU() default negative_slope


def _leaky_relu(v):
    return jnp.where(v >= 0, v, NEG_SLOPE * v)


# ---------------------------------------------------------------------------
# Fused Pallas kernel: one invocation == full forward (layers + pool + head).
# ---------------------------------------------------------------------------
def _fused_gcn_kernel(x0_ref, adj_ref, w1_ref, b1_ref, w_stack_ref, b_stack_ref,
                      pool_ref, wh_ref, bh_ref, *out_refs, depth, return_nodes):
    """Refs (all whole-array VMEM blocks, single grid step):
      x0_ref     : (1, N)  f32   initial node features (in_features == 1).
      adj_ref    : (N, N)  bf16  normalized adjacency A_hat (symmetric).
      w1_ref     : (H, 1)  f32   conv1 weight column (W1^T).
      b1_ref     : (H, 1)  f32   conv1 bias column.
      w_stack_ref: (L, H, H) bf16 residual-layer transposed weights (resident).
      b_stack_ref: (L, H, 1) f32  residual-layer bias columns.
      pool_ref   : (N, B)  bf16  block mean-pooling matrix (1/num_nodes entries).
      wh_ref     : (H, F)  f32   head_film weight.
      bh_ref     : (1, F)  f32   head_film bias.
      out_refs[0]: (B, F)  f32   module output.
      out_refs[1]: (H, N)  f32   (debug only) feature-major node activations.
    """
    out_ref = out_refs[0]
    adj = adj_ref[...]                                               # (N, N) bf16

    # ---- conv1 (in_features == 1) -----------------------------------------
    # A_hat @ (x0 W1) == (A_hat x0) outer w1.  A_hat is symmetric (GCN sym
    # normalization), so (A_hat x0)^T == x0^T A_hat: one (1,N)x(N,N) bf16 MXU
    # pass on the otherwise-idle MXU (no (N,N) f32 copy, no sublane reduce).
    ax0 = jnp.dot(x0_ref[...].astype(jnp.bfloat16), adj,
                  preferred_element_type=jnp.float32)                # (1, N) f32
    xt = _leaky_relu(w1_ref[...] * ax0 + b1_ref[...])                # (H, N) f32

    # ---- depth residual GCN layers, statically unrolled --------------------
    # Feature-major layout: Y^T = W^T X^T A_hat (lane dim = N stays dense).
    for l in range(depth):
        t = jnp.dot(w_stack_ref[l], xt.astype(jnp.bfloat16),
                    preferred_element_type=jnp.float32)              # (H, N)
        z = jnp.dot(t.astype(jnp.bfloat16), adj,
                    preferred_element_type=jnp.float32)              # (H, N)
        xt = xt + _leaky_relu(z + b_stack_ref[l])

    # ---- epilogue: global_mean_pool (MXU) + head_film -----------------------
    pooled = jnp.dot(xt.astype(jnp.bfloat16), pool_ref[...],
                     preferred_element_type=jnp.float32)             # (H, B)
    head = lax.dot_general(pooled.astype(jnp.bfloat16),
                           wh_ref[...].astype(jnp.bfloat16),
                           dimension_numbers=(((0,), (0,)), ((), ())),
                           preferred_element_type=jnp.float32)       # (B, F)
    out_ref[...] = head + bh_ref[...]

    if return_nodes:                      # debug/testing only: no HBM writeback
        out_refs[1][...] = xt             # of activations on the inference path


@functools.partial(jax.jit, static_argnames=("return_nodes",))
def gcn_fused_forward(x0_row, adj_bf16, w1_col, b1_col, w_stack, b_stack,
                      pool_bf16, w_head, b_head, *, return_nodes=False):
    N = adj_bf16.shape[0]
    H = w1_col.shape[0]
    B = pool_bf16.shape[1]
    F = w_head.shape[1]
    depth = w_stack.shape[0]

    if return_nodes:
        out_shape = (jax.ShapeDtypeStruct((B, F), jnp.float32),
                     jax.ShapeDtypeStruct((H, N), jnp.float32))
    else:
        out_shape = jax.ShapeDtypeStruct((B, F), jnp.float32)

    kernel = functools.partial(_fused_gcn_kernel, depth=depth,
                               return_nodes=return_nodes)
    # No grid / in_specs: every operand is a whole-array VMEM block (single
    # step, no pipelining / double-buffering needed at this size).  Total
    # resident footprint here is ~0.1 MiB; the explicit limit documents the
    # budget the resident-A_hat design must respect (v7x physical VMEM is
    # 64 MiB, so bf16 A_hat caps N well before v5e/v6e -- see TODO above).
    return pl.pallas_call(
        kernel,
        out_shape=out_shape,
        compiler_params=pltpu.CompilerParams(
            vmem_limit_bytes=32 * 1024 * 1024),
    )(x0_row, adj_bf16, w1_col, b1_col, w_stack, b_stack,
      pool_bf16, w_head, b_head)


# ---------------------------------------------------------------------------
# Plain-JAX / numpy glue: graph construction, normalization, parameters
# ---------------------------------------------------------------------------
def build_batched_ring_graph(batch_size, num_nodes):
    """Synthetic stand-in for edge_index_coarsen_*.pt: a bidirectional ring per
    graph, batched exactly like __init__ (offset by g*num_nodes)."""
    src, dst = [], []
    for g in range(batch_size):
        off = g * num_nodes
        for i in range(num_nodes):
            j = (i + 1) % num_nodes
            src += [off + i, off + j]
            dst += [off + j, off + i]
    return np.asarray(src, np.int32), np.asarray(dst, np.int32)


def normalized_adjacency(src, dst, n):
    # GCNConv normalization: A_hat = D^-1/2 (A + I) D^-1/2 (unit edge weights).
    a = np.zeros((n, n), np.float32)
    a[dst, src] = 1.0
    a = a + np.eye(n, dtype=np.float32)
    deg = a.sum(axis=1)
    dinv = 1.0 / np.sqrt(np.maximum(deg, 1e-12))
    return (dinv[:, None] * a * dinv[None, :]).astype(np.float32)


def make_pool_matrix(batch_size, num_nodes):
    """Constant (N, B) block mean-pooling matrix (1/num_nodes per graph block)."""
    p = np.zeros((batch_size * num_nodes, batch_size), np.float32)
    for g in range(batch_size):
        p[g * num_nodes:(g + 1) * num_nodes, g] = 1.0 / num_nodes
    return jnp.asarray(p, jnp.bfloat16)       # 1/64 is exact in bf16


def glorot(key, fan_in, fan_out):
    bound = float(np.sqrt(6.0 / (fan_in + fan_out)))
    return jax.random.uniform(key, (fan_in, fan_out), jnp.float32, -bound, bound)


def init_params(key, in_features, hidden, out_features, depth):
    keys = jax.random.split(key, depth + 1)
    return {
        "w1": glorot(keys[0], in_features, hidden),
        "b1": jnp.zeros((1, hidden), jnp.float32),          # GCNConv bias init = 0
        "w_layers": [glorot(keys[1 + d], hidden, hidden) for d in range(depth)],
        "b_layers": [jnp.zeros((1, hidden), jnp.float32) for _ in range(depth)],
        # head_film is explicitly zero-initialized in the module's __init__
        "w_head": jnp.zeros((hidden, out_features), jnp.float32),
        "b_head": jnp.zeros((1, out_features), jnp.float32),
    }


def pack_params(params):
    """Feature-major, layer-stacked layout; MXU weight operands pre-cast bf16."""
    H = params["w1"].shape[1]
    w1_col = params["w1"].T.astype(jnp.float32)                         # (H, 1)
    b1_col = params["b1"].reshape(H, 1).astype(jnp.float32)             # (H, 1)
    w_stack = jnp.stack([w.T for w in params["w_layers"]]).astype(jnp.bfloat16)
    b_stack = jnp.stack([b.reshape(H, 1) for b in params["b_layers"]]
                        ).astype(jnp.float32)
    return w1_col, b1_col, w_stack, b_stack


# ---------------------------------------------------------------------------
# References
# ---------------------------------------------------------------------------
def reference_mirrored(x0_row, adj_bf16, params, pool_bf16, w_head, b_head):
    """Plain-JAX mirror of the exact kernel math (bf16 matmul operands, f32 acc)."""
    def bdot(a, b):
        return jnp.dot(a.astype(jnp.bfloat16), b.astype(jnp.bfloat16),
                       preferred_element_type=jnp.float32)

    H = params["w1"].shape[1]
    ax0 = bdot(x0_row, adj_bf16)                                         # (1, N)
    xt = _leaky_relu(params["w1"].T * ax0 + params["b1"].reshape(H, 1))  # (H, N)
    for w, b in zip(params["w_layers"], params["b_layers"]):
        z = bdot(bdot(w.T, xt), adj_bf16)
        xt = xt + _leaky_relu(z + b.reshape(H, 1))
    pooled = bdot(xt, pool_bf16)                                         # (H, B)
    out = bdot(pooled.T, w_head) + b_head                                # (B, F)
    return xt, out


def reference_f32(x0_col, adj_f32, params):
    """Original node-major module math in f32 (semantic sanity check)."""
    x = _leaky_relu(adj_f32 @ (x0_col @ params["w1"]) + params["b1"])
    for w, b in zip(params["w_layers"], params["b_layers"]):
        x = x + _leaky_relu(adj_f32 @ (x @ w) + b)
    return x                                                             # (N, H)


# ---------------------------------------------------------------------------
if __name__ == "__main__":
    batch_size = 2
    num_nodes = 64            # nodes kept by the nan mask, per graph
    full_nodes = 100          # flattened spatial size before masking
    in_features = 1
    hidden = 32               # embed_dim (kept small)
    out_features = 16
    depth = 4                 # perceptive_field

    N = batch_size * num_nodes

    # Synthetic nan mask and batched graph (stand-ins for the on-disk assets).
    nan_mask = np.zeros((full_nodes,), bool)
    nan_mask[:num_nodes] = True
    src, dst = build_batched_ring_graph(batch_size, num_nodes)
    adj_np = normalized_adjacency(src, dst, N)
    # The kernel's layer-0 factorization (x0^T @ A_hat) relies on A_hat being
    # symmetric, which GCN symmetric normalization guarantees for undirected,
    # unit-weight graphs.  Assert it here.
    assert np.allclose(adj_np, adj_np.T), "A_hat must be symmetric"
    adj_f32 = jnp.asarray(adj_np)
    adj_bf16 = adj_f32.astype(jnp.bfloat16)              # resident MXU operand

    key = jax.random.PRNGKey(0)
    k_sst, k_params, k_head = jax.random.split(key, 3)
    sst = jax.random.normal(k_sst, (1, batch_size, full_nodes), jnp.float32)
    params = init_params(k_params, in_features, hidden, out_features, depth)

    # x = sst[0, :, nan_mask] -> (B*num_nodes,) node features, batch-major.
    x0 = np.asarray(sst[0])[:, nan_mask].reshape(-1)
    x0_row = jnp.asarray(x0, jnp.float32).reshape(1, N)   # feature-major (1, N)
    x0_col = x0_row.T                                     # node-major (N, 1)

    pool_bf16 = make_pool_matrix(batch_size, num_nodes)
    w1_col, b1_col, w_stack, b_stack = pack_params(params)

    # --- Inference path (module-faithful zero-initialized head) ------------
    out = gcn_fused_forward(x0_row, adj_bf16, w1_col, b1_col, w_stack, b_stack,
                            pool_bf16, params["w_head"], params["b_head"])
    out = jax.block_until_ready(out)
    assert out.shape == (batch_size, out_features)
    # head_film is zero-initialized, so the module output is exactly zeros.
    np.testing.assert_allclose(np.asarray(out),
                               np.zeros((batch_size, out_features), np.float32))

    # --- Debug path: random head + activation output for verification -------
    w_head_rand = glorot(k_head, hidden, out_features)
    b_head_rand = jax.random.normal(jax.random.fold_in(k_head, 1),
                                    (1, out_features), jnp.float32)
    out_dbg, nodes_t = gcn_fused_forward(
        x0_row, adj_bf16, w1_col, b1_col, w_stack, b_stack,
        pool_bf16, w_head_rand, b_head_rand, return_nodes=True)
    out_dbg = jax.block_until_ready(out_dbg)
    nodes_t = jax.block_until_ready(nodes_t)

    # 1) Tight check against a plain-JAX mirror of the kernel math.
    ref_nodes_t, ref_out_dbg = reference_mirrored(
        x0_row, adj_bf16, params, pool_bf16, w_head_rand, b_head_rand)
    np.testing.assert_allclose(np.asarray(nodes_t), np.asarray(ref_nodes_t),
                               rtol=1e-3, atol=1e-3)
    np.testing.assert_allclose(np.asarray(out_dbg), np.asarray(ref_out_dbg),
                               rtol=5e-3, atol=5e-3)

    # 2) Loose semantic check against the original f32 node-major math
    #    (only bf16 matmul-operand rounding separates the two).
    f32_nodes = reference_f32(x0_col, adj_f32, params)    # (N, H)
    np.testing.assert_allclose(np.asarray(nodes_t.T), np.asarray(f32_nodes),
                               rtol=1e-1, atol=1e-1)

    print("KERNEL_OK")
</pallas_src>

<mosaic_0001>
module attributes {stable_mosaic.version = 11 : i64} {
  func.func @_fused_gcn_kernel(%arg0: memref<1x128xf32, #tpu.memory_space<vmem>>, %arg1: memref<128x128xbf16, #tpu.memory_space<vmem>>, %arg2: memref<32x1xf32, #tpu.memory_space<vmem>>, %arg3: memref<32x1xf32, #tpu.memory_space<vmem>>, %arg4: memref<4x32x32xbf16, #tpu.memory_space<vmem>>, %arg5: memref<4x32x1xf32, #tpu.memory_space<vmem>>, %arg6: memref<128x2xbf16, #tpu.memory_space<vmem>>, %arg7: memref<32x16xf32, #tpu.memory_space<vmem>>, %arg8: memref<1x16xf32, #tpu.memory_space<vmem>>, %arg9: memref<2x16xf32, #tpu.memory_space<vmem>>) attributes {dimension_semantics = [], scalar_prefetch = 0 : i64, scratch_operands = 0 : i64, tpu.core_type = #tpu.core_type<tc>} {
    %c0 = arith.constant 0 : index
    %c0_0 = arith.constant 0 : index
    %0 = vector.load %arg1[%c0, %c0_0] : memref<128x128xbf16, #tpu.memory_space<vmem>>, vector<128x128xbf16>
    %c0_1 = arith.constant 0 : index
    %c0_2 = arith.constant 0 : index
    %1 = vector.load %arg0[%c0_1, %c0_2] : memref<1x128xf32, #tpu.memory_space<vmem>>, vector<1x128xf32>
    %2 = arith.truncf %1 : vector<1x128xf32> to vector<1x128xbf16>
    %cst = arith.constant dense<0.000000e+00> : vector<1x128xf32>
    %3 = tpu.matmul %2, %0, %cst {dimension_numbers = #tpu.dot_dimension_numbers<[1], [0], [0], [1], [0, 0, 1, 1], [], []>} : vector<1x128xbf16>, vector<128x128xbf16>, vector<1x128xf32> -> vector<1x128xf32>
    %c0_3 = arith.constant 0 : index
    %c0_4 = arith.constant 0 : index
    %4 = vector.load %arg2[%c0_3, %c0_4] : memref<32x1xf32, #tpu.memory_space<vmem>>, vector<32x1xf32>
    %5 = vector.broadcast %4 : vector<32x1xf32> to vector<32x128xf32>
    %6 = vector.broadcast %3 : vector<1x128xf32> to vector<32x128xf32>
    %7 = arith.mulf %5, %6 : vector<32x128xf32>
    %c0_5 = arith.constant 0 : index
    %c0_6 = arith.constant 0 : index
    %8 = vector.load %arg3[%c0_5, %c0_6] : memref<32x1xf32, #tpu.memory_space<vmem>>, vector<32x1xf32>
    %9 = vector.broadcast %8 : vector<32x1xf32> to vector<32x128xf32>
    %10 = arith.addf %7, %9 : vector<32x128xf32>
    %cst_7 = arith.constant 0.000000e+00 : f32
    %11 = vector.broadcast %cst_7 : f32 to vector<32x128xf32>
    %12 = arith.cmpf oge, %10, %11 : vector<32x128xf32>
    %cst_8 = arith.constant 0.00999999977 : f32
    %13 = vector.broadcast %cst_8 : f32 to vector<32x128xf32>
    %14 = arith.mulf %13, %10 : vector<32x128xf32>
    %15 = arith.select %12, %10, %14 : vector<32x128xi1>, vector<32x128xf32>
    %c0_9 = arith.constant 0 : index
    %c0_10 = arith.constant 0 : index
    %c0_11 = arith.constant 0 : index
    %16 = vector.load %arg4[%c0_9, %c0_10, %c0_11] : memref<4x32x32xbf16, #tpu.memory_space<vmem>>, vector<1x32x32xbf16>
    %17 = vector.shape_cast %16 : vector<1x32x32xbf16> to vector<32x32xbf16>
    %18 = arith.truncf %15 : vector<32x128xf32> to vector<32x128xbf16>
    %cst_12 = arith.constant dense<0.000000e+00> : vector<32x128xf32>
    %19 = tpu.matmul %17, %18, %cst_12 {dimension_numbers = #tpu.dot_dimension_numbers<[1], [0], [0], [1], [0, 0, 1, 1], [], []>} : vector<32x32xbf16>, vector<32x128xbf16>, vector<32x128xf32> -> vector<32x128xf32>
    %20 = arith.truncf %19 : vector<32x128xf32> to vector<32x128xbf16>
    %cst_13 = arith.constant dense<0.000000e+00> : vector<32x128xf32>
    %21 = tpu.matmul %20, %0, %cst_13 {dimension_numbers = #tpu.dot_dimension_numbers<[1], [0], [0], [1], [0, 0, 1, 1], [], []>} : vector<32x128xbf16>, vector<128x128xbf16>, vector<32x128xf32> -> vector<32x128xf32>
    %c0_14 = arith.constant 0 : index
    %c0_15 = arith.constant 0 : index
    %c0_16 = arith.constant 0 : index
    %22 = vector.load %arg5[%c0_14, %c0_15, %c0_16] : memref<4x32x1xf32, #tpu.memory_space<vmem>>, vector<1x32x1xf32>
    %23 = vector.shape_cast %22 : vector<1x32x1xf32> to vector<32x1xf32>
    %24 = vector.broadcast %23 : vector<32x1xf32> to vector<32x128xf32>
    %25 = arith.addf %21, %24 : vector<32x128xf32>
    %cst_17 = arith.constant 0.000000e+00 : f32
    %26 = vector.broadcast %cst_17 : f32 to vector<32x128xf32>
    %27 = arith.cmpf oge, %25, %26 : vector<32x128xf32>
    %cst_18 = arith.constant 0.00999999977 : f32
    %28 = vector.broadcast %cst_18 : f32 to vector<32x128xf32>
    %29 = arith.mulf %28, %25 : vector<32x128xf32>
    %30 = arith.select %27, %25, %29 : vector<32x128xi1>, vector<32x128xf32>
    %31 = arith.addf %15, %30 : vector<32x128xf32>
    %c1 = arith.constant 1 : index
    %c0_19 = arith.constant 0 : index
    %c0_20 = arith.constant 0 : index
    %32 = vector.load %arg4[%c1, %c0_19, %c0_20] : memref<4x32x32xbf16, #tpu.memory_space<vmem>>, vector<1x32x32xbf16>
    %33 = vector.shape_cast %32 : vector<1x32x32xbf16> to vector<32x32xbf16>
    %34 = arith.truncf %31 : vector<32x128xf32> to vector<32x128xbf16>
    %cst_21 = arith.constant dense<0.000000e+00> : vector<32x128xf32>
    %35 = tpu.matmul %33, %34, %cst_21 {dimension_numbers = #tpu.dot_dimension_numbers<[1], [0], [0], [1], [0, 0, 1, 1], [], []>} : vector<32x32xbf16>, vector<32x128xbf16>, vector<32x128xf32> -> vector<32x128xf32>
    %36 = arith.truncf %35 : vector<32x128xf32> to vector<32x128xbf16>
    %cst_22 = arith.constant dense<0.000000e+00> : vector<32x128xf32>
    %37 = tpu.matmul %36, %0, %cst_22 {dimension_numbers = #tpu.dot_dimension_numbers<[1], [0], [0], [1], [0, 0, 1, 1], [], []>} : vector<32x128xbf16>, vector<128x128xbf16>, vector<32x128xf32> -> vector<32x128xf32>
    %c1_23 = arith.constant 1 : index
    %c0_24 = arith.constant 0 : index
    %c0_25 = arith.constant 0 : index
    %38 = vector.load %arg5[%c1_23, %c0_24, %c0_25] : memref<4x32x1xf32, #tpu.memory_space<vmem>>, vector<1x32x1xf32>
    %39 = vector.shape_cast %38 : vector<1x32x1xf32> to vector<32x1xf32>
    %40 = vector.broadcast %39 : vector<32x1xf32> to vector<32x128xf32>
    %41 = arith.addf %37, %40 : vector<32x128xf32>
    %cst_26 = arith.constant 0.000000e+00 : f32
    %42 = vector.broadcast %cst_26 : f32 to vector<32x128xf32>
    %43 = arith.cmpf oge, %41, %42 : vector<32x128xf32>
    %cst_27 = arith.constant 0.00999999977 : f32
    %44 = vector.broadcast %cst_27 : f32 to vector<32x128xf32>
    %45 = arith.mulf %44, %41 : vector<32x128xf32>
    %46 = arith.select %43, %41, %45 : vector<32x128xi1>, vector<32x128xf32>
    %47 = arith.addf %31, %46 : vector<32x128xf32>
    %c2 = arith.constant 2 : index
    %c0_28 = arith.constant 0 : index
    %c0_29 = arith.constant 0 : index
    %48 = vector.load %arg4[%c2, %c0_28, %c0_29] : memref<4x32x32xbf16, #tpu.memory_space<vmem>>, vector<1x32x32xbf16>
    %49 = vector.shape_cast %48 : vector<1x32x32xbf16> to vector<32x32xbf16>
    %50 = arith.truncf %47 : vector<32x128xf32> to vector<32x128xbf16>
    %cst_30 = arith.constant dense<0.000000e+00> : vector<32x128xf32>
    %51 = tpu.matmul %49, %50, %cst_30 {dimension_numbers = #tpu.dot_dimension_numbers<[1], [0], [0], [1], [0, 0, 1, 1], [], []>} : vector<32x32xbf16>, vector<32x128xbf16>, vector<32x128xf32> -> vector<32x128xf32>
    %52 = arith.truncf %51 : vector<32x128xf32> to vector<32x128xbf16>
    %cst_31 = arith.constant dense<0.000000e+00> : vector<32x128xf32>
    %53 = tpu.matmul %52, %0, %cst_31 {dimension_numbers = #tpu.dot_dimension_numbers<[1], [0], [0], [1], [0, 0, 1, 1], [], []>} : vector<32x128xbf16>, vector<128x128xbf16>, vector<32x128xf32> -> vector<32x128xf32>
    %c2_32 = arith.constant 2 : index
    %c0_33 = arith.constant 0 : index
    %c0_34 = arith.constant 0 : index
    %54 = vector.load %arg5[%c2_32, %c0_33, %c0_34] : memref<4x32x1xf32, #tpu.memory_space<vmem>>, vector<1x32x1xf32>
    %55 = vector.shape_cast %54 : vector<1x32x1xf32> to vector<32x1xf32>
    %56 = vector.broadcast %55 : vector<32x1xf32> to vector<32x128xf32>
    %57 = arith.addf %53, %56 : vector<32x128xf32>
    %cst_35 = arith.constant 0.000000e+00 : f32
    %58 = vector.broadcast %cst_35 : f32 to vector<32x128xf32>
    %59 = arith.cmpf oge, %57, %58 : vector<32x128xf32>
    %cst_36 = arith.constant 0.00999999977 : f32
    %60 = vector.broadcast %cst_36 : f32 to vector<32x128xf32>
    %61 = arith.mulf %60, %57 : vector<32x128xf32>
    %62 = arith.select %59, %57, %61 : vector<32x128xi1>, vector<32x128xf32>
    %63 = arith.addf %47, %62 : vector<32x128xf32>
    %c3 = arith.constant 3 : index
    %c0_37 = arith.constant 0 : index
    %c0_38 = arith.constant 0 : index
    %64 = vector.load %arg4[%c3, %c0_37, %c0_38] : memref<4x32x32xbf16, #tpu.memory_space<vmem>>, vector<1x32x32xbf16>
    %65 = vector.shape_cast %64 : vector<1x32x32xbf16> to vector<32x32xbf16>
    %66 = arith.truncf %63 : vector<32x128xf32> to vector<32x128xbf16>
    %cst_39 = arith.constant dense<0.000000e+00> : vector<32x128xf32>
    %67 = tpu.matmul %65, %66, %cst_39 {dimension_numbers = #tpu.dot_dimension_numbers<[1], [0], [0], [1], [0, 0, 1, 1], [], []>} : vector<32x32xbf16>, vector<32x128xbf16>, vector<32x128xf32> -> vector<32x128xf32>
    %68 = arith.truncf %67 : vector<32x128xf32> to vector<32x128xbf16>
    %cst_40 = arith.constant dense<0.000000e+00> : vector<32x128xf32>
    %69 = tpu.matmul %68, %0, %cst_40 {dimension_numbers = #tpu.dot_dimension_numbers<[1], [0], [0], [1], [0, 0, 1, 1], [], []>} : vector<32x128xbf16>, vector<128x128xbf16>, vector<32x128xf32> -> vector<32x128xf32>
    %c3_41 = arith.constant 3 : index
    %c0_42 = arith.constant 0 : index
    %c0_43 = arith.constant 0 : index
    %70 = vector.load %arg5[%c3_41, %c0_42, %c0_43] : memref<4x32x1xf32, #tpu.memory_space<vmem>>, vector<1x32x1xf32>
    %71 = vector.shape_cast %70 : vector<1x32x1xf32> to vector<32x1xf32>
    %72 = vector.broadcast %71 : vector<32x1xf32> to vector<32x128xf32>
    %73 = arith.addf %69, %72 : vector<32x128xf32>
    %cst_44 = arith.constant 0.000000e+00 : f32
    %74 = vector.broadcast %cst_44 : f32 to vector<32x128xf32>
    %75 = arith.cmpf oge, %73, %74 : vector<32x128xf32>
    %cst_45 = arith.constant 0.00999999977 : f32
    %76 = vector.broadcast %cst_45 : f32 to vector<32x128xf32>
    %77 = arith.mulf %76, %73 : vector<32x128xf32>
    %78 = arith.select %75, %73, %77 : vector<32x128xi1>, vector<32x128xf32>
    %79 = arith.addf %63, %78 : vector<32x128xf32>
    %80 = arith.truncf %79 : vector<32x128xf32> to vector<32x128xbf16>
    %c0_46 = arith.constant 0 : index
    %c0_47 = arith.constant 0 : index
    %81 = vector.load %arg6[%c0_46, %c0_47] : memref<128x2xbf16, #tpu.memory_space<vmem>>, vector<128x2xbf16>
    %cst_48 = arith.constant dense<0.000000e+00> : vector<32x2xf32>
    %82 = tpu.matmul %80, %81, %cst_48 {dimension_numbers = #tpu.dot_dimension_numbers<[1], [0], [0], [1], [0, 0, 1, 1], [], []>} : vector<32x128xbf16>, vector<128x2xbf16>, vector<32x2xf32> -> vector<32x2xf32>
    %83 = arith.truncf %82 : vector<32x2xf32> to vector<32x2xbf16>
    %c0_49 = arith.constant 0 : index
    %c0_50 = arith.constant 0 : index
    %84 = vector.load %arg7[%c0_49, %c0_50] : memref<32x16xf32, #tpu.memory_space<vmem>>, vector<32x16xf32>
    %85 = arith.truncf %84 : vector<32x16xf32> to vector<32x16xbf16>
    %cst_51 = arith.constant dense<0.000000e+00> : vector<2x16xf32>
    %86 = tpu.matmul %83, %85, %cst_51 {dimension_numbers = #tpu.dot_dimension_numbers<[0], [0], [1], [1], [0, 1, 1, 1], [], []>} : vector<32x2xbf16>, vector<32x16xbf16>, vector<2x16xf32> -> vector<2x16xf32>
    %c0_52 = arith.constant 0 : index
    %c0_53 = arith.constant 0 : index
    %87 = vector.load %arg8[%c0_52, %c0_53] : memref<1x16xf32, #tpu.memory_space<vmem>>, vector<1x16xf32>
    %88 = vector.broadcast %87 : vector<1x16xf32> to vector<2x16xf32>
    %89 = arith.addf %86, %88 : vector<2x16xf32>
    %c0_54 = arith.constant 0 : index
    %c0_55 = arith.constant 0 : index
    %90 = vector.load %arg9[%c0_54, %c0_55] : memref<2x16xf32, #tpu.memory_space<vmem>>, vector<2x16xf32>
    tpu.vector_store %arg9[%c0_54, %c0_55], %89 {strides = array<i32>} : memref<2x16xf32, #tpu.memory_space<vmem>>, vector<2x16xf32>,
    return
  }
}

</mosaic_0001>

<llo_original>
// kernel: gcn_fused_forward.1
$region0: #{gcn_fused_forward.1}
  #allocation0 [shape = 'u32[]', space=smem, size = 0x4, offset = 0x4, fixed_abs, tag = 'smem constant byte address 0x4 - core index']
  #allocation1 [shape = 'u32[144,128]{1,0:T(1,128)}', space=vmem, size = 0x12000, scoped, tag = 'internal scratch']
  %s0 = inlined_call_operand.vmem [shape: f32[1,128], index: 0, kind: input, shape index: {}]
  %s1 = inlined_call_operand.vmem [shape: bf16[128,128], index: 1, kind: input, shape index: {}]
  %s2 = inlined_call_operand.vmem [shape: f32[32,1], index: 2, kind: input, shape index: {}]
  %s3 = inlined_call_operand.vmem [shape: f32[32,1], index: 3, kind: input, shape index: {}]
  %s4 = inlined_call_operand.vmem [shape: bf16[4,32,32], index: 4, kind: input, shape index: {}]
  %s5 = inlined_call_operand.vmem [shape: f32[4,32,1], index: 5, kind: input, shape index: {}]
  %s6 = inlined_call_operand.vmem [shape: bf16[128,2], index: 6, kind: input, shape index: {}]
  %s7 = inlined_call_operand.vmem [shape: f32[32,16], index: 7, kind: input, shape index: {}]
  %s8 = inlined_call_operand.vmem [shape: f32[1,16], index: 8, kind: input, shape index: {}]
  %s9 = inlined_call_operand.hbm [shape: f32[2,16], index: 9, kind: output, shape index: {}]
  %s10 = sld [smem:[#allocation0]]
  $region46: #{gcn_fused_forward.1} parent=0
    _
  %s12 = ssub.s32 1, %s10
  %s13 = scalar_select 0, %s12, %s10
  $region1: #{gcn_fused_forward.1} parent=0
    #allocation2 [shape = 'u8[1024]{0}', space=vmem, size = 0x400, scoped, tag = 'output window, operand 0, single buffered']
    #allocation3 [shape = 's32[1]{0}', space=sflag, size = 0x4, scoped, tag = 'scoped memory for gcn_fused_forward.1']
    %14 = vsyncpa [#allocation3], 0
    // Predicated region
    $region2: #{gcn_fused_forward.1} parent=1 // pred_check
      _
    $region3: #{gcn_fused_forward.1} parent=1 // pred_check_branch
      %16 = sbr.rel (0) target = $region5
    $region4: #{gcn_fused_forward.1} parent=1 // pred_region
      _
    $region5: #{gcn_fused_forward.1} parent=1 // pred_fallthru
      _
    // Predicated region
    $region6: #{gcn_fused_forward.1} parent=1 // pred_check
      _
    $region7: #{gcn_fused_forward.1} parent=1 // pred_check_branch
      %18 = sbr.rel (0) target = $region9
    $region8: #{gcn_fused_forward.1} parent=1 // pred_region
      _
    $region9: #{gcn_fused_forward.1} parent=1 // pred_fallthru
      _
    // Predicated region
    $region10: #{gcn_fused_forward.1} parent=1 // pred_check
      _
    $region11: #{gcn_fused_forward.1} parent=1 // pred_check_branch
      %20 = sbr.rel (0) target = $region13
    $region12: #{gcn_fused_forward.1} parent=1 // pred_region
      _
    $region13: #{gcn_fused_forward.1} parent=1 // pred_fallthru
      _
    // Predicated region
    $region14: #{gcn_fused_forward.1} parent=1 // pred_check
      _
    $region15: #{gcn_fused_forward.1} parent=1 // pred_check_branch
      %22 = sbr.rel (0) target = $region17
    $region16: #{gcn_fused_forward.1} parent=1 // pred_region
      _
    $region17: #{gcn_fused_forward.1} parent=1 // pred_fallthru
      _
    // Predicated region
    $region18: #{gcn_fused_forward.1} parent=1 // pred_check
      _
    $region19: #{gcn_fused_forward.1} parent=1 // pred_check_branch
      %24 = sbr.rel (0) target = $region21
    $region20: #{gcn_fused_forward.1} parent=1 // pred_region
      _
    $region21: #{gcn_fused_forward.1} parent=1 // pred_fallthru
      _
    // Predicated region
    $region22: #{gcn_fused_forward.1} parent=1 // pred_check
      _
    $region23: #{gcn_fused_forward.1} parent=1 // pred_check_branch
      %26 = sbr.rel (0) target = $region25
    $region24: #{gcn_fused_forward.1} parent=1 // pred_region
      _
    $region25: #{gcn_fused_forward.1} parent=1 // pred_fallthru
      _
    // Predicated region
    $region26: #{gcn_fused_forward.1} parent=1 // pred_check
      _
    $region27: #{gcn_fused_forward.1} parent=1 // pred_check_branch
      %28 = sbr.rel (0) target = $region29
    $region28: #{gcn_fused_forward.1} parent=1 // pred_region
      _
    $region29: #{gcn_fused_forward.1} parent=1 // pred_fallthru
      _
    // Predicated region
    $region30: #{gcn_fused_forward.1} parent=1 // pred_check
      _
    $region31: #{gcn_fused_forward.1} parent=1 // pred_check_branch
      %30 = sbr.rel (0) target = $region33
    $region32: #{gcn_fused_forward.1} parent=1 // pred_region
      _
    $region33: #{gcn_fused_forward.1} parent=1 // pred_fallthru
      _
    // Predicated region
    $region34: #{gcn_fused_forward.1} parent=1 // pred_check
      _
    $region35: #{gcn_fused_forward.1} parent=1 // pred_check_branch
      %32 = sbr.rel (0) target = $region37
    $region36: #{gcn_fused_forward.1} parent=1 // pred_region
      _
    $region37: #{gcn_fused_forward.1} parent=1 // pred_fallthru
      _
    %v34 = vld [vmem:[%s1] sm:$0xf]
    %v35 = vld [vmem:[%s1 + $0x4] sm:$0xf]
    %v36 = vld [vmem:[%s1 + $0x8] sm:$0xf]
    %v37 = vld [vmem:[%s1 + $0xc] sm:$0xf]
    %v38 = vld [vmem:[%s1 + $0x10] sm:$0xf]
    %v39 = vld [vmem:[%s1 + $0x14] sm:$0xf]
    %v40 = vld [vmem:[%s1 + $0x18] sm:$0xf]
    %v41 = vld [vmem:[%s1 + $0x1c] sm:$0xf]
    %v42 = vld [vmem:[%s1 + $0x20] sm:$0xf]
    %v43 = vld [vmem:[%s1 + $0x24] sm:$0xf]
    %v44 = vld [vmem:[%s1 + $0x28] sm:$0xf]
    %v45 = vld [vmem:[%s1 + $0x2c] sm:$0xf]
    %v46 = vld [vmem:[%s1 + $0x30] sm:$0xf]
    %v47 = vld [vmem:[%s1 + $0x34] sm:$0xf]
    %v48 = vld [vmem:[%s1 + $0x38] sm:$0xf]
    %v49 = vld [vmem:[%s1 + $0x3c] sm:$0xf]
    %v50 = vld [vmem:[%s0] sm:$0x1]
    %v51 = vpack.c.bf16 %v50, %v50
    %v68 = vunpack.c.l.b16 %v34
    %v69 = vunpack.c.l.b16 %v35
    %v70 = vunpack.c.l.b16 %v36
    %v71 = vunpack.c.l.b16 %v37
    %v72 = vunpack.c.l.b16 %v38
    %v73 = vunpack.c.l.b16 %v39
    %v74 = vunpack.c.l.b16 %v40
    %v75 = vunpack.c.l.b16 %v41
    %v76 = vunpack.c.l.b16 %v42
    %v77 = vunpack.c.l.b16 %v43
    %v78 = vunpack.c.l.b16 %v44
    %v79 = vunpack.c.l.b16 %v45
    %v80 = vunpack.c.l.b16 %v46
    %v81 = vunpack.c.l.b16 %v47
    %v82 = vunpack.c.l.b16 %v48
    %v83 = vunpack.c.l.b16 %v49
    %v84 = vpack.c.b16 %v69, %v68
    %v85 = vpack.c.b16 %v71, %v70
    %v86 = vpack.c.b16 %v73, %v72
    %v87 = vpack.c.b16 %v75, %v74
    %v88 = vpack.c.b16 %v77, %v76
    %v89 = vpack.c.b16 %v79, %v78
    %v90 = vpack.c.b16 %v81, %v80
    %v91 = vpack.c.b16 %v83, %v82
    %100 = vmatprep.subr.bf16.mxu0 0
    %101 = vmatpush1.bf16.msra.mxu0 %v91
    %102 = vmatprep.subr.bf16.mxu0 0
    %103 = vmatpush1.bf16.msra.mxu0 %v90
    %104 = vmatprep.subr.bf16.mxu0 0
    %105 = vmatpush1.bf16.msra.mxu0 %v89
    %106 = vmatprep.subr.bf16.mxu0 0
    %107 = vmatpush1.bf16.msra.mxu0 %v88
    %108 = vmatprep.subr.bf16.mxu0 0
    %109 = vmatpush1.bf16.msra.mxu0 %v87
    %110 = vmatprep.subr.bf16.mxu0 0
    %111 = vmatpush1.bf16.msra.mxu0 %v86
    %112 = vmatprep.subr.bf16.mxu0 0
    %113 = vmatpush1.bf16.msra.mxu0 %v85
    %114 = vmatprep.subr.bf16.mxu0 0
    %115 = vmatpush1.bf16.msra.mxu0 %v84
    %116 = vmatprep.subr.bf16.mxu0 0
    %117 = vmatpush2.bf16.msra.mxu0 0
    %118 = vmatprep.subr.bf16.mxu0 0
    %119 = vmatpush2.bf16.msra.mxu0 0
    %120 = vmatprep.subr.bf16.mxu0 0
    %121 = vmatpush2.bf16.msra.mxu0 0
    %122 = vmatprep.subr.bf16.mxu0 0
    %123 = vmatpush2.bf16.msra.mxu0 0
    %124 = vmatprep.subr.bf16.mxu0 0
    %125 = vmatpush2.bf16.msra.mxu0 0
    %126 = vmatprep.subr.bf16.mxu0 0
    %127 = vmatpush2.bf16.msra.mxu0 0
    %128 = vmatprep.subr.bf16.mxu0 0
    %129 = vmatpush2.bf16.msra.mxu0 0
    %130 = vmatprep.subr.bf16.mxu0 0
    %131 = vmatpush2.bf16.msra.mxu0 0
    %132 = vmatprep.mubr.bf16.mxu0 0
    %133 = vmatmul.mubr.bf16.gmra.mxu0 %v51
    %v134 = vpop.f32.mrf.mxu0
    %v135 = vadd.f32 0.0, %v134
    %v136 = vpop.f32.mrf.mxu0
    %v137 = vpop.f32.mrf.mxu0
    %v138 = vpop.f32.mrf.mxu0
    %139 = vdwg.mxu0
    %v140 = vld [vmem:[%s2] sm:$0xff]
    %v141 = vld [vmem:[%s2 + $0x8] sm:$0xff]
    %v142 = vld [vmem:[%s2 + $0x10] sm:$0xff]
    %v143 = vld [vmem:[%s2 + $0x18] sm:$0xff]
    %145 = vset.pattern.permute.xlu0 0
    %146 = vperm.xlu0 %145, %v140
    %v147 = vpop.permute.xlu0 %146
    %150 = vset.pattern.permute.xlu0 0
    %151 = vperm.xlu0 %150, %v141
    %v152 = vpop.permute.xlu0 %151
    %155 = vset.pattern.permute.xlu0 0
    %156 = vperm.xlu0 %155, %v142
    %v157 = vpop.permute.xlu0 %156
    %160 = vset.pattern.permute.xlu0 0
    %161 = vperm.xlu0 %160, %v143
    %v162 = vpop.permute.xlu0 %161
    %v164 = vlaneseq
    %v165 = vshrl.u32 %v164, 7
    %v166 = vsub.s32 0, %v165
    %v167 = vrot.slane %v135, %v166
    %v168 = vmul.f32 %v147, %v167
    %v169 = vmul.f32 %v152, %v167
    %v170 = vmul.f32 %v157, %v167
    %v171 = vmul.f32 %v162, %v167
    %v172 = vld [vmem:[%s3] sm:$0xff]
    %v173 = vld [vmem:[%s3 + $0x8] sm:$0xff]
    %v174 = vld [vmem:[%s3 + $0x10] sm:$0xff]
    %v175 = vld [vmem:[%s3 + $0x18] sm:$0xff]
    %177 = vset.pattern.permute.xlu0 0
    %178 = vperm.xlu0 %177, %v172
    %v179 = vpop.permute.xlu0 %178
    %182 = vset.pattern.permute.xlu0 0
    %183 = vperm.xlu0 %182, %v173
    %v184 = vpop.permute.xlu0 %183
    %187 = vset.pattern.permute.xlu0 0
    %188 = vperm.xlu0 %187, %v174
    %v189 = vpop.permute.xlu0 %188
    %192 = vset.pattern.permute.xlu0 0
    %193 = vperm.xlu0 %192, %v175
    %v194 = vpop.permute.xlu0 %193
    %v196 = vadd.f32 %v168, %v179
    %v197 = vadd.f32 %v169, %v184
    %v198 = vadd.f32 %v170, %v189
    %v199 = vadd.f32 %v171, %v194
    %vm200 = vcmp.ge.f32.partialorder %v196, 0.0
    %vm201 = vcmp.ge.f32.partialorder %v197, 0.0
    %vm202 = vcmp.ge.f32.partialorder %v198, 0.0
    %vm203 = vcmp.ge.f32.partialorder %v199, 0.0
    %v204 = vmul.f32 %v196, 0.01
    %v205 = vmul.f32 %v197, 0.01
    %v206 = vmul.f32 %v198, 0.01
    %v207 = vmul.f32 %v199, 0.01
    %v208 = vsel %vm200, %v196, %v204
    %v209 = vsel %vm201, %v197, %v205
    %v210 = vsel %vm202, %v198, %v206
    %v211 = vsel %vm203, %v199, %v207
    %v212 = vld [vmem:[%s4] sm:$0xf]
    %v213 = vld [vmem:[%s4 + $0x4] sm:$0xf]
    %v214 = vld [vmem:[%s4 + $0x8] sm:$0xf]
    %v215 = vld [vmem:[%s4 + $0xc] sm:$0xf]
    %v216 = vpack.c.bf16 %v209, %v208
    %v217 = vpack.c.bf16 %v211, %v210
    %v222 = vunpack.c.l.b16 %v212
    %v223 = vunpack.c.l.b16 %v213
    %v224 = vunpack.c.l.b16 %v214
    %v225 = vunpack.c.l.b16 %v215
    %v226 = vpack.c.b16 %v223, %v222
    %v227 = vpack.c.b16 %v225, %v224
    %vm228 = vcmask 261120
    %v230 = vsel %vm228, %v226, 0
    %v233 = vsel %vm228, %v227, 0
    %235 = vmatprep.subr.bf16.mxu0 0
    %236 = vmatpush1.bf16.msra.mxu0 0
    %237 = vmatprep.subr.bf16.mxu0 0
    %238 = vmatpush1.bf16.msra.mxu0 0
    %239 = vmatprep.subr.bf16.mxu0 0
    %240 = vmatpush1.bf16.msra.mxu0 0
    %241 = vmatprep.subr.bf16.mxu0 0
    %242 = vmatpush1.bf16.msra.mxu0 0
    %243 = vmatprep.subr.bf16.mxu0 0
    %244 = vmatpush1.bf16.msra.mxu0 0
    %245 = vmatprep.subr.bf16.mxu0 0
    %246 = vmatpush1.bf16.msra.mxu0 0
    %247 = vmatprep.subr.bf16.mxu0 0
    %248 = vmatpush1.bf16.msra.mxu0 %v217
    %249 = vmatprep.subr.bf16.mxu0 0
    %250 = vmatpush1.bf16.msra.mxu0 %v216
    %251 = vmatprep.subr.bf16.mxu0 0
    %252 = vmatpush2.bf16.msra.mxu0 0
    %253 = vmatprep.subr.bf16.mxu0 0
    %254 = vmatpush2.bf16.msra.mxu0 0
    %255 = vmatprep.subr.bf16.mxu0 0
    %256 = vmatpush2.bf16.msra.mxu0 0
    %257 = vmatprep.subr.bf16.mxu0 0
    %258 = vmatpush2.bf16.msra.mxu0 0
    %259 = vmatprep.subr.bf16.mxu0 0
    %260 = vmatpush2.bf16.msra.mxu0 0
    %261 = vmatprep.subr.bf16.mxu0 0
    %262 = vmatpush2.bf16.msra.mxu0 0
    %263 = vmatprep.subr.bf16.mxu0 0
    %264 = vmatpush2.bf16.msra.mxu0 0
    %265 = vmatprep.subr.bf16.mxu0 0
    %266 = vmatpush2.bf16.msra.mxu0 0
    %267 = vmatprep.mubr.bf16.mxu0 0
    %268 = vmatmul.mubr.bf16.gmra.mxu0 %v230
    %v269 = vpop.f32.mrf.mxu0
    %v270 = vadd.f32 0.0, %v269
    %v271 = vpop.f32.mrf.mxu0
    %v272 = vpop.f32.mrf.mxu0
    %v273 = vadd.f32 0.0, %v272
    %v274 = vpop.f32.mrf.mxu0
    %275 = vmatprep.mubr.bf16.mxu0 0
    %276 = vmatmul.mubr.bf16.gmra.mxu0 %v233
    %v277 = vpop.f32.mrf.mxu0
    %v278 = vadd.f32 0.0, %v277
    %v279 = vpop.f32.mrf.mxu0
    %v280 = vpop.f32.mrf.mxu0
    %v281 = vadd.f32 0.0, %v280
    %v282 = vpop.f32.mrf.mxu0
    %283 = vdwg.mxu0
    %v284 = vpack.c.bf16 %v273, %v270
    %v285 = vpack.c.bf16 %v281, %v278
    %v286 = vld [vmem:[%s5] sm:$0xff]
    %v287 = vld [vmem:[%s5 + $0x8] sm:$0xff]
    %v288 = vld [vmem:[%s5 + $0x10] sm:$0xff]
    %v289 = vld [vmem:[%s5 + $0x18] sm:$0xff]
    %291 = vset.pattern.permute.xlu0 0
    %292 = vperm.xlu0 %291, %v286
    %v293 = vpop.permute.xlu0 %292
    %296 = vset.pattern.permute.xlu0 0
    %297 = vperm.xlu0 %296, %v287
    %v298 = vpop.permute.xlu0 %297
    %301 = vset.pattern.permute.xlu0 0
    %302 = vperm.xlu0 %301, %v288
    %v303 = vpop.permute.xlu0 %302
    %306 = vset.pattern.permute.xlu0 0
    %307 = vperm.xlu0 %306, %v289
    %v308 = vpop.permute.xlu0 %307
    %310 = vmatprep.subr.bf16.mxu0 0
    %311 = vmatpush1.bf16.msra.mxu0 %v91
    %312 = vmatprep.subr.bf16.mxu0 0
    %313 = vmatpush1.bf16.msra.mxu0 %v90
    %314 = vmatprep.subr.bf16.mxu0 0
    %315 = vmatpush1.bf16.msra.mxu0 %v89
    %316 = vmatprep.subr.bf16.mxu0 0
    %317 = vmatpush1.bf16.msra.mxu0 %v88
    %318 = vmatprep.subr.bf16.mxu0 0
    %319 = vmatpush1.bf16.msra.mxu0 %v87
    %320 = vmatprep.subr.bf16.mxu0 0
    %321 = vmatpush1.bf16.msra.mxu0 %v86
    %322 = vmatprep.subr.bf16.mxu0 0
    %323 = vmatpush1.bf16.msra.mxu0 %v85
    %324 = vmatprep.subr.bf16.mxu0 0
    %325 = vmatpush1.bf16.msra.mxu0 %v84
    %326 = vmatprep.subr.bf16.mxu0 0
    %327 = vmatpush2.bf16.msra.mxu0 0
    %328 = vmatprep.subr.bf16.mxu0 0
    %329 = vmatpush2.bf16.msra.mxu0 0
    %330 = vmatprep.subr.bf16.mxu0 0
    %331 = vmatpush2.bf16.msra.mxu0 0
    %332 = vmatprep.subr.bf16.mxu0 0
    %333 = vmatpush2.bf16.msra.mxu0 0
    %334 = vmatprep.subr.bf16.mxu0 0
    %335 = vmatpush2.bf16.msra.mxu0 0
    %336 = vmatprep.subr.bf16.mxu0 0
    %337 = vmatpush2.bf16.msra.mxu0 0
    %338 = vmatprep.subr.bf16.mxu0 0
    %339 = vmatpush2.bf16.msra.mxu0 0
    %340 = vmatprep.subr.bf16.mxu0 0
    %341 = vmatpush2.bf16.msra.mxu0 0
    %342 = vmatprep.mubr.bf16.mxu0 0
    %343 = vmatmul.mubr.bf16.gmra.mxu0 %v284
    %v344 = vpop.f32.mrf.mxu0
    %v345 = vadd.f32 %v293, %v344
    %v346 = vpop.f32.mrf.mxu0
    %v347 = vpop.f32.mrf.mxu0
    %v348 = vadd.f32 %v298, %v347
    %v349 = vpop.f32.mrf.mxu0
    %350 = vmatprep.mubr.bf16.mxu0 0
    %351 = vmatmul.mubr.bf16.gmra.mxu0 %v285
    %v352 = vpop.f32.mrf.mxu0
    %v353 = vadd.f32 %v303, %v352
    %v354 = vpop.f32.mrf.mxu0
    %v355 = vpop.f32.mrf.mxu0
    %v356 = vadd.f32 %v308, %v355
    %v357 = vpop.f32.mrf.mxu0
    %358 = vdwg.mxu0
    %vm359 = vcmp.ge.f32.partialorder %v345, 0.0
    %vm360 = vcmp.ge.f32.partialorder %v348, 0.0
    %vm361 = vcmp.ge.f32.partialorder %v353, 0.0
    %vm362 = vcmp.ge.f32.partialorder %v356, 0.0
    %v363 = vmul.f32 %v345, 0.01
    %v364 = vmul.f32 %v348, 0.01
    %v365 = vmul.f32 %v353, 0.01
    %v366 = vmul.f32 %v356, 0.01
    %v367 = vsel %vm359, %v345, %v363
    %v368 = vsel %vm360, %v348, %v364
    %v369 = vsel %vm361, %v353, %v365
    %v370 = vsel %vm362, %v356, %v366
    %v371 = vadd.f32 %v208, %v367
    %v372 = vadd.f32 %v209, %v368
    %v373 = vadd.f32 %v210, %v369
    %v374 = vadd.f32 %v211, %v370
    %s375 = scalar_lea.vmem %s4, 16
    %v376 = vld [vmem:[%s375] sm:$0xf]
    %v377 = vld [vmem:[%s375 + $0x4] sm:$0xf]
    %v378 = vld [vmem:[%s375 + $0x8] sm:$0xf]
    %v379 = vld [vmem:[%s375 + $0xc] sm:$0xf]
    %v380 = vpack.c.bf16 %v372, %v371
    %v381 = vpack.c.bf16 %v374, %v373
    %v386 = vunpack.c.l.b16 %v376
    %v387 = vunpack.c.l.b16 %v377
    %v388 = vunpack.c.l.b16 %v378
    %v389 = vunpack.c.l.b16 %v379
    %v390 = vpack.c.b16 %v387, %v386
    %v391 = vpack.c.b16 %v389, %v388
    %v393 = vsel %vm228, %v390, 0
    %v396 = vsel %vm228, %v391, 0
    %398 = vmatprep.subr.bf16.mxu0 0
    %399 = vmatpush1.bf16.msra.mxu0 0
    %400 = vmatprep.subr.bf16.mxu0 0
    %401 = vmatpush1.bf16.msra.mxu0 0
    %402 = vmatprep.subr.bf16.mxu0 0
    %403 = vmatpush1.bf16.msra.mxu0 0
    %404 = vmatprep.subr.bf16.mxu0 0
    %405 = vmatpush1.bf16.msra.mxu0 0
    %406 = vmatprep.subr.bf16.mxu0 0
    %407 = vmatpush1.bf16.msra.mxu0 0
    %408 = vmatprep.subr.bf16.mxu0 0
    %409 = vmatpush1.bf16.msra.mxu0 0
    %410 = vmatprep.subr.bf16.mxu0 0
    %411 = vmatpush1.bf16.msra.mxu0 %v381
    %412 = vmatprep.subr.bf16.mxu0 0
    %413 = vmatpush1.bf16.msra.mxu0 %v380
    %414 = vmatprep.subr.bf16.mxu0 0
    %415 = vmatpush2.bf16.msra.mxu0 0
    %416 = vmatprep.subr.bf16.mxu0 0
    %417 = vmatpush2.bf16.msra.mxu0 0
    %418 = vmatprep.subr.bf16.mxu0 0
    %419 = vmatpush2.bf16.msra.mxu0 0
    %420 = vmatprep.subr.bf16.mxu0 0
    %421 = vmatpush2.bf16.msra.mxu0 0
    %422 = vmatprep.subr.bf16.mxu0 0
    %423 = vmatpush2.bf16.msra.mxu0 0
    %424 = vmatprep.subr.bf16.mxu0 0
    %425 = vmatpush2.bf16.msra.mxu0 0
    %426 = vmatprep.subr.bf16.mxu0 0
    %427 = vmatpush2.bf16.msra.mxu0 0
    %428 = vmatprep.subr.bf16.mxu0 0
    %429 = vmatpush2.bf16.msra.mxu0 0
    %430 = vmatprep.mubr.bf16.mxu0 0
    %431 = vmatmul.mubr.bf16.gmra.mxu0 %v393
    %v432 = vpop.f32.mrf.mxu0
    %v433 = vadd.f32 0.0, %v432
    %v434 = vpop.f32.mrf.mxu0
    %v435 = vpop.f32.mrf.mxu0
    %v436 = vadd.f32 0.0, %v435
    %v437 = vpop.f32.mrf.mxu0
    %438 = vmatprep.mubr.bf16.mxu0 0
    %439 = vmatmul.mubr.bf16.gmra.mxu0 %v396
    %v440 = vpop.f32.mrf.mxu0
    %v441 = vadd.f32 0.0, %v440
    %v442 = vpop.f32.mrf.mxu0
    %v443 = vpop.f32.mrf.mxu0
    %v444 = vadd.f32 0.0, %v443
    %v445 = vpop.f32.mrf.mxu0
    %446 = vdwg.mxu0
    %v447 = vpack.c.bf16 %v436, %v433
    %v448 = vpack.c.bf16 %v444, %v441
    %s449 = scalar_lea.vmem %s5, 32
    %v450 = vld [vmem:[%s449] sm:$0xff]
    %v451 = vld [vmem:[%s449 + $0x8] sm:$0xff]
    %v452 = vld [vmem:[%s449 + $0x10] sm:$0xff]
    %v453 = vld [vmem:[%s449 + $0x18] sm:$0xff]
    %455 = vset.pattern.permute.xlu0 0
    %456 = vperm.xlu0 %455, %v450
    %v457 = vpop.permute.xlu0 %456
    %460 = vset.pattern.permute.xlu0 0
    %461 = vperm.xlu0 %460, %v451
    %v462 = vpop.permute.xlu0 %461
    %465 = vset.pattern.permute.xlu0 0
    %466 = vperm.xlu0 %465, %v452
    %v467 = vpop.permute.xlu0 %466
    %470 = vset.pattern.permute.xlu0 0
    %471 = vperm.xlu0 %470, %v453
    %v472 = vpop.permute.xlu0 %471
    %474 = vmatprep.subr.bf16.mxu0 0
    %475 = vmatpush1.bf16.msra.mxu0 %v91
    %476 = vmatprep.subr.bf16.mxu0 0
    %477 = vmatpush1.bf16.msra.mxu0 %v90
    %478 = vmatprep.subr.bf16.mxu0 0
    %479 = vmatpush1.bf16.msra.mxu0 %v89
    %480 = vmatprep.subr.bf16.mxu0 0
    %481 = vmatpush1.bf16.msra.mxu0 %v88
    %482 = vmatprep.subr.bf16.mxu0 0
    %483 = vmatpush1.bf16.msra.mxu0 %v87
    %484 = vmatprep.subr.bf16.mxu0 0
    %485 = vmatpush1.bf16.msra.mxu0 %v86
    %486 = vmatprep.subr.bf16.mxu0 0
    %487 = vmatpush1.bf16.msra.mxu0 %v85
    %488 = vmatprep.subr.bf16.mxu0 0
    %489 = vmatpush1.bf16.msra.mxu0 %v84
    %490 = vmatprep.subr.bf16.mxu0 0
    %491 = vmatpush2.bf16.msra.mxu0 0
    %492 = vmatprep.subr.bf16.mxu0 0
    %493 = vmatpush2.bf16.msra.mxu0 0
    %494 = vmatprep.subr.bf16.mxu0 0
    %495 = vmatpush2.bf16.msra.mxu0 0
    %496 = vmatprep.subr.bf16.mxu0 0
    %497 = vmatpush2.bf16.msra.mxu0 0
    %498 = vmatprep.subr.bf16.mxu0 0
    %499 = vmatpush2.bf16.msra.mxu0 0
    %500 = vmatprep.subr.bf16.mxu0 0
    %501 = vmatpush2.bf16.msra.mxu0 0
    %502 = vmatprep.subr.bf16.mxu0 0
    %503 = vmatpush2.bf16.msra.mxu0 0
    %504 = vmatprep.subr.bf16.mxu0 0
    %505 = vmatpush2.bf16.msra.mxu0 0
    %506 = vmatprep.mubr.bf16.mxu0 0
    %507 = vmatmul.mubr.bf16.gmra.mxu0 %v447
    %v508 = vpop.f32.mrf.mxu0
    %v509 = vadd.f32 %v457, %v508
    %v510 = vpop.f32.mrf.mxu0
    %v511 = vpop.f32.mrf.mxu0
    %v512 = vadd.f32 %v462, %v511
    %v513 = vpop.f32.mrf.mxu0
    %514 = vmatprep.mubr.bf16.mxu0 0
    %515 = vmatmul.mubr.bf16.gmra.mxu0 %v448
    %v516 = vpop.f32.mrf.mxu0
    %v517 = vadd.f32 %v467, %v516
    %v518 = vpop.f32.mrf.mxu0
    %v519 = vpop.f32.mrf.mxu0
    %v520 = vadd.f32 %v472, %v519
    %v521 = vpop.f32.mrf.mxu0
    %522 = vdwg.mxu0
    %vm523 = vcmp.ge.f32.partialorder %v509, 0.0
    %vm524 = vcmp.ge.f32.partialorder %v512, 0.0
    %vm525 = vcmp.ge.f32.partialorder %v517, 0.0
    %vm526 = vcmp.ge.f32.partialorder %v520, 0.0
    %v527 = vmul.f32 %v509, 0.01
    %v528 = vmul.f32 %v512, 0.01
    %v529 = vmul.f32 %v517, 0.01
    %v530 = vmul.f32 %v520, 0.01
    %v531 = vsel %vm523, %v509, %v527
    %v532 = vsel %vm524, %v512, %v528
    %v533 = vsel %vm525, %v517, %v529
    %v534 = vsel %vm526, %v520, %v530
    %v535 = vadd.f32 %v371, %v531
    %v536 = vadd.f32 %v372, %v532
    %v537 = vadd.f32 %v373, %v533
    %v538 = vadd.f32 %v374, %v534
    %s539 = scalar_lea.vmem %s4, 32
    %v540 = vld [vmem:[%s539] sm:$0xf]
    %v541 = vld [vmem:[%s539 + $0x4] sm:$0xf]
    %v542 = vld [vmem:[%s539 + $0x8] sm:$0xf]
    %v543 = vld [vmem:[%s539 + $0xc] sm:$0xf]
    %v544 = vpack.c.bf16 %v536, %v535
    %v545 = vpack.c.bf16 %v538, %v537
    %v550 = vunpack.c.l.b16 %v540
    %v551 = vunpack.c.l.b16 %v541
    %v552 = vunpack.c.l.b16 %v542
    %v553 = vunpack.c.l.b16 %v543
    %v554 = vpack.c.b16 %v551, %v550
    %v555 = vpack.c.b16 %v553, %v552
    %v557 = vsel %vm228, %v554, 0
    %v560 = vsel %vm228, %v555, 0
    %562 = vmatprep.subr.bf16.mxu0 0
    %563 = vmatpush1.bf16.msra.mxu0 0
    %564 = vmatprep.subr.bf16.mxu0 0
    %565 = vmatpush1.bf16.msra.mxu0 0
    %566 = vmatprep.subr.bf16.mxu0 0
    %567 = vmatpush1.bf16.msra.mxu0 0
    %568 = vmatprep.subr.bf16.mxu0 0
    %569 = vmatpush1.bf16.msra.mxu0 0
    %570 = vmatprep.subr.bf16.mxu0 0
    %571 = vmatpush1.bf16.msra.mxu0 0
    %572 = vmatprep.subr.bf16.mxu0 0
    %573 = vmatpush1.bf16.msra.mxu0 0
    %574 = vmatprep.subr.bf16.mxu0 0
    %575 = vmatpush1.bf16.msra.mxu0 %v545
    %576 = vmatprep.subr.bf16.mxu0 0
    %577 = vmatpush1.bf16.msra.mxu0 %v544
    %578 = vmatprep.subr.bf16.mxu0 0
    %579 = vmatpush2.bf16.msra.mxu0 0
    %580 = vmatprep.subr.bf16.mxu0 0
    %581 = vmatpush2.bf16.msra.mxu0 0
    %582 = vmatprep.subr.bf16.mxu0 0
    %583 = vmatpush2.bf16.msra.mxu0 0
    %584 = vmatprep.subr.bf16.mxu0 0
    %585 = vmatpush2.bf16.msra.mxu0 0
    %586 = vmatprep.subr.bf16.mxu0 0
    %587 = vmatpush2.bf16.msra.mxu0 0
    %588 = vmatprep.subr.bf16.mxu0 0
    %589 = vmatpush2.bf16.msra.mxu0 0
    %590 = vmatprep.subr.bf16.mxu0 0
    %591 = vmatpush2.bf16.msra.mxu0 0
    %592 = vmatprep.subr.bf16.mxu0 0
    %593 = vmatpush2.bf16.msra.mxu0 0
    %594 = vmatprep.mubr.bf16.mxu0 0
    %595 = vmatmul.mubr.bf16.gmra.mxu0 %v557
    %v596 = vpop.f32.mrf.mxu0
    %v597 = vadd.f32 0.0, %v596
    %v598 = vpop.f32.mrf.mxu0
    %v599 = vpop.f32.mrf.mxu0
    %v600 = vadd.f32 0.0, %v599
    %v601 = vpop.f32.mrf.mxu0
    %602 = vmatprep.mubr.bf16.mxu0 0
    %603 = vmatmul.mubr.bf16.gmra.mxu0 %v560
    %v604 = vpop.f32.mrf.mxu0
    %v605 = vadd.f32 0.0, %v604
    %v606 = vpop.f32.mrf.mxu0
    %v607 = vpop.f32.mrf.mxu0
    %v608 = vadd.f32 0.0, %v607
    %v609 = vpop.f32.mrf.mxu0
    %610 = vdwg.mxu0
    %v611 = vpack.c.bf16 %v600, %v597
    %v612 = vpack.c.bf16 %v608, %v605
    %s613 = scalar_lea.vmem %s5, 64
    %v614 = vld [vmem:[%s613] sm:$0xff]
    %v615 = vld [vmem:[%s613 + $0x8] sm:$0xff]
    %v616 = vld [vmem:[%s613 + $0x10] sm:$0xff]
    %v617 = vld [vmem:[%s613 + $0x18] sm:$0xff]
    %619 = vset.pattern.permute.xlu0 0
    %620 = vperm.xlu0 %619, %v614
    %v621 = vpop.permute.xlu0 %620
    %624 = vset.pattern.permute.xlu0 0
    %625 = vperm.xlu0 %624, %v615
    %v626 = vpop.permute.xlu0 %625
    %629 = vset.pattern.permute.xlu0 0
    %630 = vperm.xlu0 %629, %v616
    %v631 = vpop.permute.xlu0 %630
    %634 = vset.pattern.permute.xlu0 0
    %635 = vperm.xlu0 %634, %v617
    %v636 = vpop.permute.xlu0 %635
    %638 = vmatprep.subr.bf16.mxu0 0
    %639 = vmatpush1.bf16.msra.mxu0 %v91
    %640 = vmatprep.subr.bf16.mxu0 0
    %641 = vmatpush1.bf16.msra.mxu0 %v90
    %642 = vmatprep.subr.bf16.mxu0 0
    %643 = vmatpush1.bf16.msra.mxu0 %v89
    %644 = vmatprep.subr.bf16.mxu0 0
    %645 = vmatpush1.bf16.msra.mxu0 %v88
    %646 = vmatprep.subr.bf16.mxu0 0
    %647 = vmatpush1.bf16.msra.mxu0 %v87
    %648 = vmatprep.subr.bf16.mxu0 0
    %649 = vmatpush1.bf16.msra.mxu0 %v86
    %650 = vmatprep.subr.bf16.mxu0 0
    %651 = vmatpush1.bf16.msra.mxu0 %v85
    %652 = vmatprep.subr.bf16.mxu0 0
    %653 = vmatpush1.bf16.msra.mxu0 %v84
    %654 = vmatprep.subr.bf16.mxu0 0
    %655 = vmatpush2.bf16.msra.mxu0 0
    %656 = vmatprep.subr.bf16.mxu0 0
    %657 = vmatpush2.bf16.msra.mxu0 0
    %658 = vmatprep.subr.bf16.mxu0 0
    %659 = vmatpush2.bf16.msra.mxu0 0
    %660 = vmatprep.subr.bf16.mxu0 0
    %661 = vmatpush2.bf16.msra.mxu0 0
    %662 = vmatprep.subr.bf16.mxu0 0
    %663 = vmatpush2.bf16.msra.mxu0 0
    %664 = vmatprep.subr.bf16.mxu0 0
    %665 = vmatpush2.bf16.msra.mxu0 0
    %666 = vmatprep.subr.bf16.mxu0 0
    %667 = vmatpush2.bf16.msra.mxu0 0
    %668 = vmatprep.subr.bf16.mxu0 0
    %669 = vmatpush2.bf16.msra.mxu0 0
    %670 = vmatprep.mubr.bf16.mxu0 0
    %671 = vmatmul.mubr.bf16.gmra.mxu0 %v611
    %v672 = vpop.f32.mrf.mxu0
    %v673 = vadd.f32 %v621, %v672
    %v674 = vpop.f32.mrf.mxu0
    %v675 = vpop.f32.mrf.mxu0
    %v676 = vadd.f32 %v626, %v675
    %v677 = vpop.f32.mrf.mxu0
    %678 = vmatprep.mubr.bf16.mxu0 0
    %679 = vmatmul.mubr.bf16.gmra.mxu0 %v612
    %v680 = vpop.f32.mrf.mxu0
    %v681 = vadd.f32 %v631, %v680
    %v682 = vpop.f32.mrf.mxu0
    %v683 = vpop.f32.mrf.mxu0
    %v684 = vadd.f32 %v636, %v683
    %v685 = vpop.f32.mrf.mxu0
    %686 = vdwg.mxu0
    %vm687 = vcmp.ge.f32.partialorder %v673, 0.0
    %vm688 = vcmp.ge.f32.partialorder %v676, 0.0
    %vm689 = vcmp.ge.f32.partialorder %v681, 0.0
    %vm690 = vcmp.ge.f32.partialorder %v684, 0.0
    %v691 = vmul.f32 %v673, 0.01
    %v692 = vmul.f32 %v676, 0.01
    %v693 = vmul.f32 %v681, 0.01
    %v694 = vmul.f32 %v684, 0.01
    %v695 = vsel %vm687, %v673, %v691
    %v696 = vsel %vm688, %v676, %v692
    %v697 = vsel %vm689, %v681, %v693
    %v698 = vsel %vm690, %v684, %v694
    %v699 = vadd.f32 %v535, %v695
    %v700 = vadd.f32 %v536, %v696
    %v701 = vadd.f32 %v537, %v697
    %v702 = vadd.f32 %v538, %v698
    %s703 = scalar_lea.vmem %s4, 48
    %v704 = vld [vmem:[%s703] sm:$0xf]
    %v705 = vld [vmem:[%s703 + $0x4] sm:$0xf]
    %v706 = vld [vmem:[%s703 + $0x8] sm:$0xf]
    %v707 = vld [vmem:[%s703 + $0xc] sm:$0xf]
    %v708 = vpack.c.bf16 %v700, %v699
    %v709 = vpack.c.bf16 %v702, %v701
    %v714 = vunpack.c.l.b16 %v704
    %v715 = vunpack.c.l.b16 %v705
    %v716 = vunpack.c.l.b16 %v706
    %v717 = vunpack.c.l.b16 %v707
    %v718 = vpack.c.b16 %v715, %v714
    %v719 = vpack.c.b16 %v717, %v716
    %v721 = vsel %vm228, %v718, 0
    %v724 = vsel %vm228, %v719, 0
    %726 = vmatprep.subr.bf16.mxu0 0
    %727 = vmatpush1.bf16.msra.mxu0 0
    %728 = vmatprep.subr.bf16.mxu0 0
    %729 = vmatpush1.bf16.msra.mxu0 0
    %730 = vmatprep.subr.bf16.mxu0 0
    %731 = vmatpush1.bf16.msra.mxu0 0
    %732 = vmatprep.subr.bf16.mxu0 0
    %733 = vmatpush1.bf16.msra.mxu0 0
    %734 = vmatprep.subr.bf16.mxu0 0
    %735 = vmatpush1.bf16.msra.mxu0 0
    %736 = vmatprep.subr.bf16.mxu0 0
    %737 = vmatpush1.bf16.msra.mxu0 0
    %738 = vmatprep.subr.bf16.mxu0 0
    %739 = vmatpush1.bf16.msra.mxu0 %v709
    %740 = vmatprep.subr.bf16.mxu0 0
    %741 = vmatpush1.bf16.msra.mxu0 %v708
    %742 = vmatprep.subr.bf16.mxu0 0
    %743 = vmatpush2.bf16.msra.mxu0 0
    %744 = vmatprep.subr.bf16.mxu0 0
    %745 = vmatpush2.bf16.msra.mxu0 0
    %746 = vmatprep.subr.bf16.mxu0 0
    %747 = vmatpush2.bf16.msra.mxu0 0
    %748 = vmatprep.subr.bf16.mxu0 0
    %749 = vmatpush2.bf16.msra.mxu0 0
    %750 = vmatprep.subr.bf16.mxu0 0
    %751 = vmatpush2.bf16.msra.mxu0 0
    %752 = vmatprep.subr.bf16.mxu0 0
    %753 = vmatpush2.bf16.msra.mxu0 0
    %754 = vmatprep.subr.bf16.mxu0 0
    %755 = vmatpush2.bf16.msra.mxu0 0
    %756 = vmatprep.subr.bf16.mxu0 0
    %757 = vmatpush2.bf16.msra.mxu0 0
    %758 = vmatprep.mubr.bf16.mxu0 0
    %759 = vmatmul.mubr.bf16.gmra.mxu0 %v721
    %v760 = vpop.f32.mrf.mxu0
    %v761 = vadd.f32 0.0, %v760
    %v762 = vpop.f32.mrf.mxu0
    %v763 = vpop.f32.mrf.mxu0
    %v764 = vadd.f32 0.0, %v763
    %v765 = vpop.f32.mrf.mxu0
    %766 = vmatprep.mubr.bf16.mxu0 0
    %767 = vmatmul.mubr.bf16.gmra.mxu0 %v724
    %v768 = vpop.f32.mrf.mxu0
    %v769 = vadd.f32 0.0, %v768
    %v770 = vpop.f32.mrf.mxu0
    %v771 = vpop.f32.mrf.mxu0
    %v772 = vadd.f32 0.0, %v771
    %v773 = vpop.f32.mrf.mxu0
    %774 = vdwg.mxu0
    %v775 = vpack.c.bf16 %v764, %v761
    %v776 = vpack.c.bf16 %v772, %v769
    %s777 = scalar_lea.vmem %s5, 96
    %v778 = vld [vmem:[%s777] sm:$0xff]
    %v779 = vld [vmem:[%s777 + $0x8] sm:$0xff]
    %v780 = vld [vmem:[%s777 + $0x10] sm:$0xff]
    %v781 = vld [vmem:[%s777 + $0x18] sm:$0xff]
    %783 = vset.pattern.permute.xlu0 0
    %784 = vperm.xlu0 %783, %v778
    %v785 = vpop.permute.xlu0 %784
    %788 = vset.pattern.permute.xlu0 0
    %789 = vperm.xlu0 %788, %v779
    %v790 = vpop.permute.xlu0 %789
    %793 = vset.pattern.permute.xlu0 0
    %794 = vperm.xlu0 %793, %v780
    %v795 = vpop.permute.xlu0 %794
    %798 = vset.pattern.permute.xlu0 0
    %799 = vperm.xlu0 %798, %v781
    %v800 = vpop.permute.xlu0 %799
    %802 = vmatprep.subr.bf16.mxu0 0
    %803 = vmatpush1.bf16.msra.mxu0 %v91
    %804 = vmatprep.subr.bf16.mxu0 0
    %805 = vmatpush1.bf16.msra.mxu0 %v90
    %806 = vmatprep.subr.bf16.mxu0 0
    %807 = vmatpush1.bf16.msra.mxu0 %v89
    %808 = vmatprep.subr.bf16.mxu0 0
    %809 = vmatpush1.bf16.msra.mxu0 %v88
    %810 = vmatprep.subr.bf16.mxu0 0
    %811 = vmatpush1.bf16.msra.mxu0 %v87
    %812 = vmatprep.subr.bf16.mxu0 0
    %813 = vmatpush1.bf16.msra.mxu0 %v86
    %814 = vmatprep.subr.bf16.mxu0 0
    %815 = vmatpush1.bf16.msra.mxu0 %v85
    %816 = vmatprep.subr.bf16.mxu0 0
    %817 = vmatpush1.bf16.msra.mxu0 %v84
    %818 = vmatprep.subr.bf16.mxu0 0
    %819 = vmatpush2.bf16.msra.mxu0 0
    %820 = vmatprep.subr.bf16.mxu0 0
    %821 = vmatpush2.bf16.msra.mxu0 0
    %822 = vmatprep.subr.bf16.mxu0 0
    %823 = vmatpush2.bf16.msra.mxu0 0
    %824 = vmatprep.subr.bf16.mxu0 0
    %825 = vmatpush2.bf16.msra.mxu0 0
    %826 = vmatprep.subr.bf16.mxu0 0
    %827 = vmatpush2.bf16.msra.mxu0 0
    %828 = vmatprep.subr.bf16.mxu0 0
    %829 = vmatpush2.bf16.msra.mxu0 0
    %830 = vmatprep.subr.bf16.mxu0 0
    %831 = vmatpush2.bf16.msra.mxu0 0
    %832 = vmatprep.subr.bf16.mxu0 0
    %833 = vmatpush2.bf16.msra.mxu0 0
    %834 = vmatprep.mubr.bf16.mxu0 0
    %835 = vmatmul.mubr.bf16.gmra.mxu0 %v775
    %v836 = vpop.f32.mrf.mxu0
    %v837 = vadd.f32 %v785, %v836
    %v838 = vpop.f32.mrf.mxu0
    %v839 = vpop.f32.mrf.mxu0
    %v840 = vadd.f32 %v790, %v839
    %v841 = vpop.f32.mrf.mxu0
    %842 = vmatprep.mubr.bf16.mxu0 0
    %843 = vmatmul.mubr.bf16.gmra.mxu0 %v776
    %v844 = vpop.f32.mrf.mxu0
    %v845 = vadd.f32 %v795, %v844
    %v846 = vpop.f32.mrf.mxu0
    %v847 = vpop.f32.mrf.mxu0
    %v848 = vadd.f32 %v800, %v847
    %v849 = vpop.f32.mrf.mxu0
    %850 = vdwg.mxu0
    %vm851 = vcmp.ge.f32.partialorder %v837, 0.0
    %vm852 = vcmp.ge.f32.partialorder %v840, 0.0
    %vm853 = vcmp.ge.f32.partialorder %v845, 0.0
    %vm854 = vcmp.ge.f32.partialorder %v848, 0.0
    %v855 = vmul.f32 %v837, 0.01
    %v856 = vmul.f32 %v840, 0.01
    %v857 = vmul.f32 %v845, 0.01
    %v858 = vmul.f32 %v848, 0.01
    %v859 = vsel %vm851, %v837, %v855
    %v860 = vsel %vm852, %v840, %v856
    %v861 = vsel %vm853, %v845, %v857
    %v862 = vsel %vm854, %v848, %v858
    %v863 = vadd.f32 %v699, %v859
    %v864 = vadd.f32 %v700, %v860
    %v865 = vadd.f32 %v701, %v861
    %v866 = vadd.f32 %v702, %v862
    %v867 = vpack.c.bf16 %v864, %v863
    %v868 = vpack.c.bf16 %v866, %v865
    %v869 = vld [vmem:[%s6] sm:$0xf]
    %v870 = vld [vmem:[%s6 + $0x4] sm:$0xf]
    %v871 = vld [vmem:[%s6 + $0x8] sm:$0xf]
    %v872 = vld [vmem:[%s6 + $0xc] sm:$0xf]
    %v873 = vld [vmem:[%s6 + $0x10] sm:$0xf]
    %v874 = vld [vmem:[%s6 + $0x14] sm:$0xf]
    %v875 = vld [vmem:[%s6 + $0x18] sm:$0xf]
    %v876 = vld [vmem:[%s6 + $0x1c] sm:$0xf]
    %v877 = vld [vmem:[%s6 + $0x20] sm:$0xf]
    %v878 = vld [vmem:[%s6 + $0x24] sm:$0xf]
    %v879 = vld [vmem:[%s6 + $0x28] sm:$0xf]
    %v880 = vld [vmem:[%s6 + $0x2c] sm:$0xf]
    %v881 = vld [vmem:[%s6 + $0x30] sm:$0xf]
    %v882 = vld [vmem:[%s6 + $0x34] sm:$0xf]
    %v883 = vld [vmem:[%s6 + $0x38] sm:$0xf]
    %v884 = vld [vmem:[%s6 + $0x3c] sm:$0xf]
    %v901 = vunpack.c.l.b16 %v869
    %v902 = vunpack.c.l.b16 %v870
    %v903 = vunpack.c.l.b16 %v871
    %v904 = vunpack.c.l.b16 %v872
    %v905 = vunpack.c.l.b16 %v873
    %v906 = vunpack.c.l.b16 %v874
    %v907 = vunpack.c.l.b16 %v875
    %v908 = vunpack.c.l.b16 %v876
    %v909 = vunpack.c.l.b16 %v877
    %v910 = vunpack.c.l.b16 %v878
    %v911 = vunpack.c.l.b16 %v879
    %v912 = vunpack.c.l.b16 %v880
    %v913 = vunpack.c.l.b16 %v881
    %v914 = vunpack.c.l.b16 %v882
    %v915 = vunpack.c.l.b16 %v883
    %v916 = vunpack.c.l.b16 %v884
    %v917 = vpack.c.b16 %v902, %v901
    %v918 = vpack.c.b16 %v904, %v903
    %v919 = vpack.c.b16 %v906, %v905
    %v920 = vpack.c.b16 %v908, %v907
    %v921 = vpack.c.b16 %v910, %v909
    %v922 = vpack.c.b16 %v912, %v911
    %v923 = vpack.c.b16 %v914, %v913
    %v924 = vpack.c.b16 %v916, %v915
    %933 = vmatprep.subr.bf16.mxu0 0
    %934 = vmatpush1.bf16.msra.mxu0 %v924
    %935 = vmatprep.subr.bf16.mxu0 0
    %936 = vmatpush1.bf16.msra.mxu0 %v923
    %937 = vmatprep.subr.bf16.mxu0 0
    %938 = vmatpush1.bf16.msra.mxu0 %v922
    %939 = vmatprep.subr.bf16.mxu0 0
    %940 = vmatpush1.bf16.msra.mxu0 %v921
    %941 = vmatprep.subr.bf16.mxu0 0
    %942 = vmatpush1.bf16.msra.mxu0 %v920
    %943 = vmatprep.subr.bf16.mxu0 0
    %944 = vmatpush1.bf16.msra.mxu0 %v919
    %945 = vmatprep.subr.bf16.mxu0 0
    %946 = vmatpush1.bf16.msra.mxu0 %v918
    %947 = vmatprep.subr.bf16.mxu0 0
    %948 = vmatpush1.bf16.msra.mxu0 %v917
    %949 = vmatprep.subr.bf16.mxu0 0
    %950 = vmatpush2.bf16.msra.mxu0 0
    %951 = vmatprep.subr.bf16.mxu0 0
    %952 = vmatpush2.bf16.msra.mxu0 0
    %953 = vmatprep.subr.bf16.mxu0 0
    %954 = vmatpush2.bf16.msra.mxu0 0
    %955 = vmatprep.subr.bf16.mxu0 0
    %956 = vmatpush2.bf16.msra.mxu0 0
    %957 = vmatprep.subr.bf16.mxu0 0
    %958 = vmatpush2.bf16.msra.mxu0 0
    %959 = vmatprep.subr.bf16.mxu0 0
    %960 = vmatpush2.bf16.msra.mxu0 0
    %961 = vmatprep.subr.bf16.mxu0 0
    %962 = vmatpush2.bf16.msra.mxu0 0
    %963 = vmatprep.subr.bf16.mxu0 0
    %964 = vmatpush2.bf16.msra.mxu0 0
    %965 = vmatprep.mubr.bf16.mxu0 0
    %966 = vmatmul.mubr.bf16.gmra.mxu0 %v867
    %v967 = vpop.f32.mrf.mxu0
    %v968 = vadd.f32 0.0, %v967
    %v969 = vpop.f32.mrf.mxu0
    %v970 = vpop.f32.mrf.mxu0
    %v971 = vadd.f32 0.0, %v970
    %v972 = vpop.f32.mrf.mxu0
    %973 = vmatprep.mubr.bf16.mxu0 0
    %974 = vmatmul.mubr.bf16.gmra.mxu0 %v868
    %v975 = vpop.f32.mrf.mxu0
    %v976 = vadd.f32 0.0, %v975
    %v977 = vpop.f32.mrf.mxu0
    %v978 = vpop.f32.mrf.mxu0
    %v979 = vadd.f32 0.0, %v978
    %v980 = vpop.f32.mrf.mxu0
    %981 = vdwg.mxu0
    %v982 = vpack.c.bf16 %v971, %v968
    %v983 = vpack.c.bf16 %v979, %v976
    %v984 = vld [vmem:[%s7] sm:$0xff]
    %v985 = vld [vmem:[%s7 + $0x8] sm:$0xff]
    %v986 = vld [vmem:[%s7 + $0x10] sm:$0xff]
    %v987 = vld [vmem:[%s7 + $0x18] sm:$0xff]
    %v988 = vpack.c.bf16 %v985, %v984
    %v989 = vpack.c.bf16 %v987, %v986
    %v990 = vld [vmem:[%s8] sm:$0x1]
    %v992 = vlaneseq
    %v993 = vshrl.u32 %v992, 7
    %v994 = vsub.s32 0, %v993
    %v995 = vrot.slane %v990, %v994
    %997 = vxpose.xlu0.c.b16.start [1/8] %v982, 128
    %998 = vxpose.xlu0.c.b16.cont [2/8] %v983, 128
    %999 = vxpose.xlu0.c.b16.cont [3/8] 0, 128
    %1000 = vxpose.xlu0.c.b16.cont [4/8] 0, 128
    %1001 = vxpose.xlu0.c.b16.cont [5/8] 0, 128
    %1002 = vxpose.xlu0.c.b16.cont [6/8] 0, 128
    %1003 = vxpose.xlu0.c.b16.cont [7/8] 0, 128
    %1004 = vxpose.xlu0.c.b16.end [8/8] 0, 128
    %v1005 = vpop.trf.xlu0
    %v1006 = vpop.trf.xlu0
    %v1007 = vpop.trf.xlu0
    %v1008 = vpop.trf.xlu0
    %v1009 = vpop.trf.xlu0
    %v1010 = vpop.trf.xlu0
    %v1011 = vpop.trf.xlu0
    %v1012 = vpop.trf.xlu0
    %v1014 = vsel %vm228, %v1005, 0
    %1016 = vmatprep.subr.bf16.mxu0 0
    %1017 = vmatpush1.bf16.msra.mxu0 0
    %1018 = vmatprep.subr.bf16.mxu0 0
    %1019 = vmatpush1.bf16.msra.mxu0 0
    %1020 = vmatprep.subr.bf16.mxu0 0
    %1021 = vmatpush1.bf16.msra.mxu0 0
    %1022 = vmatprep.subr.bf16.mxu0 0
    %1023 = vmatpush1.bf16.msra.mxu0 0
    %1024 = vmatprep.subr.bf16.mxu0 0
    %1025 = vmatpush1.bf16.msra.mxu0 0
    %1026 = vmatprep.subr.bf16.mxu0 0
    %1027 = vmatpush1.bf16.msra.mxu0 0
    %1028 = vmatprep.subr.bf16.mxu0 0
    %1029 = vmatpush1.bf16.msra.mxu0 %v989
    %1030 = vmatprep.subr.bf16.mxu0 0
    %1031 = vmatpush1.bf16.msra.mxu0 %v988
    %1032 = vmatprep.subr.bf16.mxu0 0
    %1033 = vmatpush2.bf16.msra.mxu0 0
    %1034 = vmatprep.subr.bf16.mxu0 0
    %1035 = vmatpush2.bf16.msra.mxu0 0
    %1036 = vmatprep.subr.bf16.mxu0 0
    %1037 = vmatpush2.bf16.msra.mxu0 0
    %1038 = vmatprep.subr.bf16.mxu0 0
    %1039 = vmatpush2.bf16.msra.mxu0 0
    %1040 = vmatprep.subr.bf16.mxu0 0
    %1041 = vmatpush2.bf16.msra.mxu0 0
    %1042 = vmatprep.subr.bf16.mxu0 0
    %1043 = vmatpush2.bf16.msra.mxu0 0
    %1044 = vmatprep.subr.bf16.mxu0 0
    %1045 = vmatpush2.bf16.msra.mxu0 0
    %1046 = vmatprep.subr.bf16.mxu0 0
    %1047 = vmatpush2.bf16.msra.mxu0 0
    %1048 = vmatprep.mubr.bf16.mxu0 0
    %1049 = vmatmul.mubr.bf16.gmra.mxu0 %v1014
    %v1050 = vpop.f32.mrf.mxu0
    %v1051 = vadd.f32 %v995, %v1050
    %v1052 = vpop.f32.mrf.mxu0
    %v1053 = vpop.f32.mrf.mxu0
    %v1054 = vpop.f32.mrf.mxu0
    %1055 = vdwg.mxu0
    %vm1056 = vcmask 123904
    %1057 = vst.msk [vmem:[#allocation2] sm:$0x3] %vm1056, %v1051
    // Predicated region
    $region38: #{gcn_fused_forward.1} parent=1 // pred_check
      _
    $region39: #{gcn_fused_forward.1} parent=1 // pred_check_branch
      %1059 = sbr.rel (0) target = $region41
    $region40: #{gcn_fused_forward.1} parent=1 // pred_region
      %s1061 = ssub.s32 32, 32
      %1062 = vsyncadd [#allocation3], %s1061
      %s1064 = sshll.u32 [#allocation2], 4
      %s1065 = int_to_ptr.vmem [resolvable:$true] %s1064
      %1067 = dma.vmem_to_hbm [thread:$0]  %s1065, 32, %s9, [#allocation3]
    $region41: #{gcn_fused_forward.1} parent=1 // pred_fallthru
      _
    // Predicated region
    $region42: #{gcn_fused_forward.1} parent=1 // pred_check
      _
    $region43: #{gcn_fused_forward.1} parent=1 // pred_check_branch
      %1069 = sbr.rel (0) target = $region45
    $region44: #{gcn_fused_forward.1} parent=1 // pred_region
      %1070 = dma.done [#allocation3], 32
    $region45: #{gcn_fused_forward.1} parent=1 // pred_fallthru
      _
    %1071 = vsyncpa [#allocation3], 1

</llo_original>
